<compile_context>
chip_gen: v5e
topology: v5e:2x2
jax: 0.10.0
libtpu: 0.0.40
codegen_flags: <defaults>
</compile_context>

<pallas_src>
import jax
import jax.numpy as jnp
from jax.experimental import pallas as pl
from jax.experimental.pallas import tpu as pltpu


def _round_up(x, m):
    return (x + m - 1) // m * m


def _make_tcn_kernel(layer_cfgs, c_in_raw, l_in_raw, margin, l_buf, batch_tile,
                     c_max_pad, c_out_last, compute_dtype, slab_dtype):
    """Build the fused TCN kernel body.

    layer_cfgs[i] = (c_in_pad, c_out_pad, dilation, k_size, l_out) -- static Python ints.
    """
    num_layers = len(layer_cfgs)
    data_w = batch_tile * l_buf          # lane width of the (batch-tiled) activation region

    def kernel(*refs):
        x_ref = refs[0]
        w_refs = refs[1:1 + 2 * num_layers:2]
        b_refs = refs[2:2 + 2 * num_layers:2]
        o_ref = refs[1 + 2 * num_layers]
        act_ref = refs[2 + 2 * num_layers]

        # ---- targeted zeroing (no full-slab memset) -------------------------------------
        # Left margin read by every layer's shifted taps.  Zeroed per step (tiny) instead of
        # only on step 0 so there is no cross-step slab state and the grid can be "parallel".
        if margin > 0:
            act_ref[0:c_max_pad, 0:margin] = jnp.zeros((c_max_pad, margin), slab_dtype)

        # Layer 0 reads rows [0:c_in_pad0] of the data region: zero them (covers the padded
        # channel rows and the stale right tails left by the previous grid step), then place
        # the fresh input rows.  Everything deeper layers read is rewritten by the layer above.
        c_in_p0 = layer_cfgs[0][0]
        act_ref[0:c_in_p0, margin:margin + data_w] = jnp.zeros((c_in_p0, data_w), slab_dtype)
        for r in range(batch_tile):
            base = margin + r * l_buf
            act_ref[0:c_in_raw, base:base + l_in_raw] = x_ref[r].astype(slab_dtype)

        # ---- fused layer stack ------------------------------------------------------------
        for i, (c_in_p, c_out_p, dilation, k_size, l_out) in enumerate(layer_cfgs):
            w = w_refs[i][...]                           # (c_out_p, k_size * c_in_p)
            if k_size * c_in_p <= 128:
                # Small contraction: im2col the K shifted windows along sublanes -> one MXU
                # dot (contraction is padded to 128 by the MXU anyway -> K x fewer pushes).
                taps = []
                for k in range(k_size):
                    shift = (k_size - 1 - k) * dilation  # left offset of tap k
                    start = margin - shift
                    taps.append(act_ref[0:c_in_p, start:start + data_w])
                cols = taps[0] if k_size == 1 else jnp.concatenate(taps, axis=0)
                y = jnp.dot(w, cols.astype(compute_dtype),
                            preferred_element_type=jnp.float32)
            else:
                # Large contraction: K accumulating dots, no (K*C_in_pad, L) concat temp.
                y = None
                for k in range(k_size):
                    shift = (k_size - 1 - k) * dilation
                    start = margin - shift
                    tap = act_ref[0:c_in_p, start:start + data_w].astype(compute_dtype)
                    yk = jnp.dot(w[:, k * c_in_p:(k + 1) * c_in_p], tap,
                                 preferred_element_type=jnp.float32)
                    y = yk if y is None else y + yk

            y = jnp.maximum(y + b_refs[i][...], 0.0)     # bias + ReLU, f32 epilogue

            if i + 1 < num_layers:
                act_ref[0:c_out_p, margin:margin + data_w] = y.astype(slab_dtype)
                # Zero only each row's right tail beyond this layer's true output length so it
                # reads back as conv zero-padding for the next layer (no iota/where masking).
                if l_out < l_buf:
                    tail = jnp.zeros((c_out_p, l_buf - l_out), slab_dtype)
                    for r in range(batch_tile):
                        base = margin + r * l_buf
                        act_ref[0:c_out_p, base + l_out:base + l_buf] = tail
            else:
                # Final layer: store exact (C_out_last, L_final) rows directly to the output
                # block -- removes the separate HBM read+write of a post-kernel slice.
                for r in range(batch_tile):
                    o_ref[r] = y[0:c_out_last, r * l_buf:r * l_buf + l_out].astype(o_ref.dtype)

    return kernel


def temporal_conv_net(x, params, kernel_size=2, compute_dtype=jnp.bfloat16,
                      slab_dtype=jnp.float32, batch_tile=None):
    """Fused TCN forward. x: (N, C_in, L) f32 -> (N, C_out_last, L_final) f32.

    compute_dtype: MXU operand dtype (bf16 is MXU-native on v5e/v6e/v7x; f32 is the opt-in
                   accuracy mode).  Accumulation and the bias+ReLU epilogue are always f32.
    slab_dtype:    dtype of the VMEM activation slab (bf16 halves its footprint; recommended
                   on v7x with 64 MiB VMEM).  Channel padding adapts (8 for f32, 16 for bf16).
    batch_tile:    rows processed per grid step (None -> largest divisor of N up to 8).
    """
    n, c_in, l_in = x.shape
    num_layers = len(params)
    assert num_layers >= 1

    sub = 8 * 4 // jnp.dtype(slab_dtype).itemsize       # sublane tile: 8 (f32) / 16 (bf16)

    if batch_tile is None:
        batch_tile = 1
        for cand in range(min(n, 8), 0, -1):
            if n % cand == 0:
                batch_tile = cand
                break
    assert n % batch_tile == 0

    # Static per-layer geometry.
    cfgs = []
    l_cur = l_in
    c_prev_pad = _round_up(c_in, sub)
    max_pad = 0
    for i, (w, _) in enumerate(params):
        c_out = w.shape[0]
        d = 2 ** i
        pad = (kernel_size - 1) * d
        max_pad = max(max_pad, pad)
        l_out = l_cur + pad                              # = L + 2*pad - d*(K-1), symmetric pad
        c_out_pad = _round_up(c_out, sub)
        cfgs.append((c_prev_pad, c_out_pad, d, kernel_size, l_out))
        l_cur = l_out
        c_prev_pad = c_out_pad

    l_final = l_cur
    c_out_last = params[-1][0].shape[0]
    l_buf = _round_up(l_final, 128)                      # lane-dense per-row time axis
    margin = _round_up(max_pad, 128)                     # lane-aligned left zero margin
    c_max_pad = max([_round_up(c_in, sub)] + [c[1] for c in cfgs])

    # Fused-tap weights (C_out_pad, K*C_in_pad) in compute_dtype; zero-padded f32 biases.
    flat_inputs = [x]
    in_specs = [pl.BlockSpec((batch_tile, c_in, l_in), lambda i: (i, 0, 0))]
    for (w, b), (c_in_p, c_out_p, _, _, _) in zip(params, cfgs):
        c_out, c_in_l, k = w.shape
        w_p = jnp.zeros((c_out_p, k, c_in_p), jnp.float32)
        w_p = w_p.at[:c_out, :, :c_in_l].set(jnp.transpose(w, (0, 2, 1)))   # (O, K, I)
        w2 = w_p.reshape(c_out_p, k * c_in_p).astype(compute_dtype)
        b_p = jnp.zeros((c_out_p, 1), jnp.float32).at[:c_out, 0].set(b)
        flat_inputs += [w2, b_p]
        in_specs += [
            pl.BlockSpec((c_out_p, k * c_in_p), lambda i: (0, 0)),
            pl.BlockSpec((c_out_p, 1), lambda i: (0, 0)),
        ]

    kernel = _make_tcn_kernel(cfgs, c_in, l_in, margin, l_buf, batch_tile,
                              c_max_pad, c_out_last, compute_dtype, slab_dtype)

    # Explicit VMEM budget: slab + double-buffered I/O blocks + weights, with headroom.
    slab_bytes = c_max_pad * (margin + batch_tile * l_buf) * jnp.dtype(slab_dtype).itemsize
    io_bytes = 2 * batch_tile * (c_in * l_in + c_out_last * l_final) * 4
    w_bytes = 2 * sum(int(a.size) * a.dtype.itemsize for a in flat_inputs[1:])
    vmem_limit = int(min(max(1.5 * (slab_bytes + io_bytes + w_bytes) + (4 << 20), 32 << 20),
                         128 << 20))

    return pl.pallas_call(
        kernel,
        out_shape=jax.ShapeDtypeStruct((n, c_out_last, l_final), jnp.float32),
        grid=(n // batch_tile,),
        in_specs=in_specs,
        out_specs=pl.BlockSpec((batch_tile, c_out_last, l_final), lambda i: (i, 0, 0)),
        scratch_shapes=[pltpu.VMEM((c_max_pad, margin + batch_tile * l_buf), slab_dtype)],
        compiler_params=pltpu.CompilerParams(
            dimension_semantics=("parallel",),
            vmem_limit_bytes=vmem_limit,
        ),
    )(*flat_inputs)


def init_tcn_params(key, num_inputs, num_channels, kernel_size=2):
    """Deterministic init mirroring nn.Conv1d default shapes: w (O, I, K), b (O,)."""
    params = []
    for i, out_ch in enumerate(num_channels):
        in_ch = num_inputs if i == 0 else num_channels[i - 1]
        key, kw, kb = jax.random.split(key, 3)
        fan_in = in_ch * kernel_size
        bound = 1.0 / jnp.sqrt(fan_in)
        w = jax.random.uniform(kw, (out_ch, in_ch, kernel_size), jnp.float32, -bound, bound)
        b = jax.random.uniform(kb, (out_ch,), jnp.float32, -bound, bound)
        params.append((w, b))
    return params


def _reference_forward(x, params, kernel_size=2, compute_dtype=jnp.float32):
    """Plain-JAX reference (lax conv). compute_dtype mimics the kernel's MXU-operand cast."""
    for i, (w, b) in enumerate(params):
        d = 2 ** i
        pad = (kernel_size - 1) * d
        xq = x.astype(compute_dtype).astype(jnp.float32)
        wq = w.astype(compute_dtype).astype(jnp.float32)
        y = jax.lax.conv_general_dilated(
            xq, wq, window_strides=(1,), padding=[(pad, pad)],
            rhs_dilation=(d,), dimension_numbers=("NCH", "OIH", "NCH"),
        )
        x = jnp.maximum(y + b[None, :, None], 0.0)
    return x


if __name__ == "__main__":
    key = jax.random.PRNGKey(0)
    k_x, k_p = jax.random.split(key)

    # Small shapes consistent with the module: (batch, num_inputs, length)
    batch, num_inputs, length = 2, 4, 16
    num_channels = [8, 16]          # two TCN layers, dilations 1 and 2
    kernel_size = 2

    x = jax.random.normal(k_x, (batch, num_inputs, length), jnp.float32)
    params = init_tcn_params(k_p, num_inputs, num_channels, kernel_size)

    # Accuracy mode: f32 MXU operands -> bit-level agreement with the plain-JAX reference.
    out_f32 = jax.block_until_ready(
        temporal_conv_net(x, params, kernel_size, compute_dtype=jnp.float32))
    ref = _reference_forward(x, params, kernel_size)
    assert out_f32.shape == ref.shape, (out_f32.shape, ref.shape)
    assert jnp.allclose(out_f32, ref, atol=1e-5, rtol=1e-5), \
        float(jnp.max(jnp.abs(out_f32 - ref)))

    # Default fast path: bf16 MXU operands (MXU-native on v5e/v6e/v7x), f32 accumulation;
    # loose tolerance because the reference only mimics the in-kernel operand quantization.
    out_bf = jax.block_until_ready(temporal_conv_net(x, params, kernel_size))
    ref_bf = _reference_forward(x, params, kernel_size, compute_dtype=jnp.bfloat16)
    assert out_bf.shape == ref_bf.shape, (out_bf.shape, ref_bf.shape)
    assert jnp.allclose(out_bf, ref_bf, atol=5e-2, rtol=5e-2), \
        float(jnp.max(jnp.abs(out_bf - ref_bf)))

    print("KERNEL_OK")
</pallas_src>

<mosaic_0001>
module attributes {stable_mosaic.version = 11 : i64} {
  func.func @kernel(%arg0: i32, %arg1: memref<2x4x16xf32, #tpu.memory_space<vmem>>, %arg2: memref<8x16xf32, #tpu.memory_space<vmem>>, %arg3: memref<8x1xf32, #tpu.memory_space<vmem>>, %arg4: memref<16x16xf32, #tpu.memory_space<vmem>>, %arg5: memref<16x1xf32, #tpu.memory_space<vmem>>, %arg6: memref<2x16x19xf32, #tpu.memory_space<vmem>>, %arg7: memref<16x384xf32, #tpu.memory_space<vmem>>) attributes {dimension_semantics = [#tpu.dimension_semantics<parallel>], iteration_bounds = array<i64: 1>, scalar_prefetch = 0 : i64, scratch_operands = 1 : i64, tpu.core_type = #tpu.core_type<tc>, window_params = [{transform_indices = @transform_0, window_bounds = array<i64: 2, 4, 16>}, {pipeline_mode = #tpu.pipeline_mode<synchronous>, transform_indices = @transform_1, window_bounds = array<i64: 8, 16>}, {pipeline_mode = #tpu.pipeline_mode<synchronous>, transform_indices = @transform_2, window_bounds = array<i64: 8, 1>}, {pipeline_mode = #tpu.pipeline_mode<synchronous>, transform_indices = @transform_3, window_bounds = array<i64: 16, 16>}, {pipeline_mode = #tpu.pipeline_mode<synchronous>, transform_indices = @transform_4, window_bounds = array<i64: 16, 1>}, {transform_indices = @transform_5, window_bounds = array<i64: 2, 16, 19>}]} {
    %cst = arith.constant 0.000000e+00 : f32
    %0 = vector.broadcast %cst : f32 to vector<16x128xf32>
    %c0 = arith.constant 0 : index
    %c0_0 = arith.constant 0 : index
    %1 = vector.load %arg7[%c0, %c0_0] : memref<16x384xf32, #tpu.memory_space<vmem>>, vector<16x128xf32>
    tpu.vector_store %arg7[%c0, %c0_0], %0 {strides = array<i32>} : memref<16x384xf32, #tpu.memory_space<vmem>>, vector<16x128xf32>,
    %cst_1 = arith.constant 0.000000e+00 : f32
    %2 = vector.broadcast %cst_1 : f32 to vector<8x256xf32>
    %c0_2 = arith.constant 0 : index
    %c128 = arith.constant 128 : index
    %3 = vector.load %arg7[%c0_2, %c128] : memref<16x384xf32, #tpu.memory_space<vmem>>, vector<8x256xf32>
    tpu.vector_store %arg7[%c0_2, %c128], %2 {strides = array<i32>} : memref<16x384xf32, #tpu.memory_space<vmem>>, vector<8x256xf32>,
    %c0_3 = arith.constant 0 : index
    %c0_4 = arith.constant 0 : index
    %c0_5 = arith.constant 0 : index
    %4 = vector.load %arg1[%c0_3, %c0_4, %c0_5] : memref<2x4x16xf32, #tpu.memory_space<vmem>>, vector<1x4x16xf32>
    %5 = vector.shape_cast %4 : vector<1x4x16xf32> to vector<4x16xf32>
    %c0_6 = arith.constant 0 : index
    %c128_7 = arith.constant 128 : index
    %6 = vector.load %arg7[%c0_6, %c128_7] : memref<16x384xf32, #tpu.memory_space<vmem>>, vector<4x16xf32>
    tpu.vector_store %arg7[%c0_6, %c128_7], %5 {strides = array<i32>} : memref<16x384xf32, #tpu.memory_space<vmem>>, vector<4x16xf32>,
    %c1 = arith.constant 1 : index
    %c0_8 = arith.constant 0 : index
    %c0_9 = arith.constant 0 : index
    %7 = vector.load %arg1[%c1, %c0_8, %c0_9] : memref<2x4x16xf32, #tpu.memory_space<vmem>>, vector<1x4x16xf32>
    %8 = vector.shape_cast %7 : vector<1x4x16xf32> to vector<4x16xf32>
    %c0_10 = arith.constant 0 : index
    %c256 = arith.constant 256 : index
    %9 = vector.load %arg7[%c0_10, %c256] : memref<16x384xf32, #tpu.memory_space<vmem>>, vector<4x16xf32>
    tpu.vector_store %arg7[%c0_10, %c256], %8 {strides = array<i32>} : memref<16x384xf32, #tpu.memory_space<vmem>>, vector<4x16xf32>,
    %c0_11 = arith.constant 0 : index
    %c0_12 = arith.constant 0 : index
    %10 = vector.load %arg2[%c0_11, %c0_12] : memref<8x16xf32, #tpu.memory_space<vmem>>, vector<8x16xf32>
    %c0_13 = arith.constant 0 : index
    %c127 = arith.constant 127 : index
    %11 = vector.load %arg7[%c0_13, %c127] : memref<16x384xf32, #tpu.memory_space<vmem>>, vector<8x256xf32>
    %c0_14 = arith.constant 0 : index
    %c128_15 = arith.constant 128 : index
    %12 = vector.load %arg7[%c0_14, %c128_15] : memref<16x384xf32, #tpu.memory_space<vmem>>, vector<8x256xf32>
    %13 = tpu.concatenate %11, %12 in 0 : vector<8x256xf32>, vector<8x256xf32> -> vector<16x256xf32>
    %cst_16 = arith.constant dense<0.000000e+00> : vector<8x256xf32>
    %14 = tpu.matmul %10, %13, %cst_16 {dimension_numbers = #tpu.dot_dimension_numbers<[1], [0], [0], [1], [0, 0, 1, 1], [], []>} : vector<8x16xf32>, vector<16x256xf32>, vector<8x256xf32> -> vector<8x256xf32>
    %c0_17 = arith.constant 0 : index
    %c0_18 = arith.constant 0 : index
    %15 = vector.load %arg3[%c0_17, %c0_18] : memref<8x1xf32, #tpu.memory_space<vmem>>, vector<8x1xf32>
    %16 = vector.broadcast %15 : vector<8x1xf32> to vector<8x256xf32>
    %17 = arith.addf %14, %16 : vector<8x256xf32>
    %cst_19 = arith.constant 0.000000e+00 : f32
    %18 = vector.broadcast %cst_19 : f32 to vector<8x256xf32>
    %19 = arith.maximumf %17, %18 : vector<8x256xf32>
    %c0_20 = arith.constant 0 : index
    %c128_21 = arith.constant 128 : index
    %20 = vector.load %arg7[%c0_20, %c128_21] : memref<16x384xf32, #tpu.memory_space<vmem>>, vector<8x256xf32>
    tpu.vector_store %arg7[%c0_20, %c128_21], %19 {strides = array<i32>} : memref<16x384xf32, #tpu.memory_space<vmem>>, vector<8x256xf32>,
    %cst_22 = arith.constant 0.000000e+00 : f32
    %21 = vector.broadcast %cst_22 : f32 to vector<8x111xf32>
    %c0_23 = arith.constant 0 : index
    %c145 = arith.constant 145 : index
    %22 = vector.load %arg7[%c0_23, %c145] : memref<16x384xf32, #tpu.memory_space<vmem>>, vector<8x111xf32>
    tpu.vector_store %arg7[%c0_23, %c145], %21 {strides = array<i32>} : memref<16x384xf32, #tpu.memory_space<vmem>>, vector<8x111xf32>,
    %c0_24 = arith.constant 0 : index
    %c273 = arith.constant 273 : index
    %23 = vector.load %arg7[%c0_24, %c273] : memref<16x384xf32, #tpu.memory_space<vmem>>, vector<8x111xf32>
    tpu.vector_store %arg7[%c0_24, %c273], %21 {strides = array<i32>} : memref<16x384xf32, #tpu.memory_space<vmem>>, vector<8x111xf32>,
    %c0_25 = arith.constant 0 : index
    %c0_26 = arith.constant 0 : index
    %24 = vector.load %arg4[%c0_25, %c0_26] : memref<16x16xf32, #tpu.memory_space<vmem>>, vector<16x16xf32>
    %c0_27 = arith.constant 0 : index
    %c126 = arith.constant 126 : index
    %25 = vector.load %arg7[%c0_27, %c126] : memref<16x384xf32, #tpu.memory_space<vmem>>, vector<8x256xf32>
    %c0_28 = arith.constant 0 : index
    %c128_29 = arith.constant 128 : index
    %26 = vector.load %arg7[%c0_28, %c128_29] : memref<16x384xf32, #tpu.memory_space<vmem>>, vector<8x256xf32>
    %27 = tpu.concatenate %25, %26 in 0 : vector<8x256xf32>, vector<8x256xf32> -> vector<16x256xf32>
    %cst_30 = arith.constant dense<0.000000e+00> : vector<16x256xf32>
    %28 = tpu.matmul %24, %27, %cst_30 {dimension_numbers = #tpu.dot_dimension_numbers<[1], [0], [0], [1], [0, 0, 1, 1], [], []>} : vector<16x16xf32>, vector<16x256xf32>, vector<16x256xf32> -> vector<16x256xf32>
    %c0_31 = arith.constant 0 : index
    %c0_32 = arith.constant 0 : index
    %29 = vector.load %arg5[%c0_31, %c0_32] : memref<16x1xf32, #tpu.memory_space<vmem>>, vector<16x1xf32>
    %30 = vector.broadcast %29 : vector<16x1xf32> to vector<16x256xf32>
    %31 = arith.addf %28, %30 : vector<16x256xf32>
    %cst_33 = arith.constant 0.000000e+00 : f32
    %32 = vector.broadcast %cst_33 : f32 to vector<16x256xf32>
    %33 = arith.maximumf %31, %32 : vector<16x256xf32>
    %34 = vector.extract_strided_slice %33 {offsets = [0, 0], sizes = [16, 19], strides = [1, 1]} : vector<16x256xf32> to vector<16x19xf32>
    %c0_34 = arith.constant 0 : index
    %c0_35 = arith.constant 0 : index
    %c0_36 = arith.constant 0 : index
    %35 = vector.load %arg6[%c0_34, %c0_35, %c0_36] : memref<2x16x19xf32, #tpu.memory_space<vmem>>, vector<1x16x19xf32>
    %36 = vector.shape_cast %35 : vector<1x16x19xf32> to vector<16x19xf32>
    %37 = vector.shape_cast %34 : vector<16x19xf32> to vector<1x16x19xf32>
    tpu.vector_store %arg6[%c0_34, %c0_35, %c0_36], %37 {strides = array<i32>} : memref<2x16x19xf32, #tpu.memory_space<vmem>>, vector<1x16x19xf32>,
    %38 = vector.extract_strided_slice %33 {offsets = [0, 128], sizes = [16, 19], strides = [1, 1]} : vector<16x256xf32> to vector<16x19xf32>
    %c1_37 = arith.constant 1 : index
    %c0_38 = arith.constant 0 : index
    %c0_39 = arith.constant 0 : index
    %39 = vector.load %arg6[%c1_37, %c0_38, %c0_39] : memref<2x16x19xf32, #tpu.memory_space<vmem>>, vector<1x16x19xf32>
    %40 = vector.shape_cast %39 : vector<1x16x19xf32> to vector<16x19xf32>
    %41 = vector.shape_cast %38 : vector<16x19xf32> to vector<1x16x19xf32>
    tpu.vector_store %arg6[%c1_37, %c0_38, %c0_39], %41 {strides = array<i32>} : memref<2x16x19xf32, #tpu.memory_space<vmem>>, vector<1x16x19xf32>,
    return
  }
  func.func @transform_0(%arg0: i32) -> (i32, i32, i32) {
    %c0_i32 = arith.constant 0 : i32
    %c0_i32_0 = arith.constant 0 : i32
    %c0_i32_1 = arith.constant 0 : i32
    return %arg0, %c0_i32, %c0_i32_0 : i32, i32, i32
  }
  func.func @transform_1(%arg0: i32) -> (i32, i32) {
    %c0_i32 = arith.constant 0 : i32
    %c0_i32_0 = arith.constant 0 : i32
    %c0_i32_1 = arith.constant 0 : i32
    return %c0_i32, %c0_i32_0 : i32, i32
  }
  func.func @transform_2(%arg0: i32) -> (i32, i32) {
    %c0_i32 = arith.constant 0 : i32
    %c0_i32_0 = arith.constant 0 : i32
    %c0_i32_1 = arith.constant 0 : i32
    return %c0_i32, %c0_i32_0 : i32, i32
  }
  func.func @transform_3(%arg0: i32) -> (i32, i32) {
    %c0_i32 = arith.constant 0 : i32
    %c0_i32_0 = arith.constant 0 : i32
    %c0_i32_1 = arith.constant 0 : i32
    return %c0_i32, %c0_i32_0 : i32, i32
  }
  func.func @transform_4(%arg0: i32) -> (i32, i32) {
    %c0_i32 = arith.constant 0 : i32
    %c0_i32_0 = arith.constant 0 : i32
    %c0_i32_1 = arith.constant 0 : i32
    return %c0_i32, %c0_i32_0 : i32, i32
  }
  func.func @transform_5(%arg0: i32) -> (i32, i32, i32) {
    %c0_i32 = arith.constant 0 : i32
    %c0_i32_0 = arith.constant 0 : i32
    %c0_i32_1 = arith.constant 0 : i32
    return %arg0, %c0_i32, %c0_i32_0 : i32, i32, i32
  }
}

</mosaic_0001>

<llo_original>
// kernel: tpu_custom_call.1
$region0: #{tpu_custom_call.1}
  #allocation0 [shape = 'u32[]', space=smem, size = 0x4, offset = 0x4, fixed_abs, tag = 'smem constant byte address 0x4 - core index']
  #allocation1 [shape = 'u32[72,128]{1,0:T(1,128)}', space=vmem, size = 0x9000, scoped, tag = 'internal scratch']
  #allocation2 [shape = 'f32[16,384]{1,0:T(8,128)}', space=vmem, size = 0x6000, scoped, tag = 'scratch operand']
  %s0 = inlined_call_operand.vmem [shape: f32[2,4,16], index: 0, kind: input, shape index: {}]
  %s1 = inlined_call_operand.hbm [shape: f32[8,16], index: 1, kind: input, shape index: {}]
  %s2 = inlined_call_operand.vmem [shape: f32[8,1], index: 2, kind: input, shape index: {}]
  %s3 = inlined_call_operand.vmem [shape: f32[16,16], index: 3, kind: input, shape index: {}]
  %s4 = inlined_call_operand.vmem [shape: f32[16,1], index: 4, kind: input, shape index: {}]
  %s5 = inlined_call_operand.hbm [shape: f32[2,16,19], index: 5, kind: output, shape index: {}]
  %s6 = sld [smem:[#allocation0]]
  $region34: #{tpu_custom_call.1} parent=0
    _
  %s8 = ssub.s32 1, %s6
  %s9 = scalar_select 0, %s8, %s6
  $region1: #{tpu_custom_call.1} parent=0
    #allocation3 [shape = 'u8[4096]{0}', space=vmem, size = 0x1000, scoped, tag = 'input window, operand 1, single buffered']
    #allocation4 [shape = 's32[1]{0}', space=sflag, size = 0x4, scoped, tag = 'scoped memory for tpu_custom_call.1']
    #allocation5 [shape = 's32[1]{0}', space=sflag, size = 0x4, scoped, tag = 'scoped memory for tpu_custom_call.1']
    #allocation6 [shape = 'u8[16384]{0}', space=vmem, size = 0x4000, scoped, tag = 'output window, operand 0, single buffered']
    %10 = vsyncpa [#allocation4], 0
    %11 = vsyncpa [#allocation5], 0
    // Predicated region
    $region2: #{tpu_custom_call.1} parent=1 // pred_check
      _
    $region3: #{tpu_custom_call.1} parent=1 // pred_check_branch
      %13 = sbr.rel (0) target = $region5
    $region4: #{tpu_custom_call.1} parent=1 // pred_region
      _
    $region5: #{tpu_custom_call.1} parent=1 // pred_fallthru
      _
    // Predicated region
    $region6: #{tpu_custom_call.1} parent=1 // pred_check
      _
    $region7: #{tpu_custom_call.1} parent=1 // pred_check_branch
      %15 = sbr.rel (0) target = $region9
    $region8: #{tpu_custom_call.1} parent=1 // pred_region
      %17 = vsyncadd [#allocation4], 0
      %s19 = sshll.u32 %s1, 4
      %s20 = int_to_ptr.hbm [resolvable:$true] %s19
      %s21 = sshll.u32 [#allocation3], 4
      %s22 = int_to_ptr.vmem [resolvable:$true] %s21
      %24 = dma.hbm_to_vmem [thread:$0]  %s20, 128, %s22, [#allocation4]
    $region9: #{tpu_custom_call.1} parent=1 // pred_fallthru
      _
    // Predicated region
    $region10: #{tpu_custom_call.1} parent=1 // pred_check
      _
    $region11: #{tpu_custom_call.1} parent=1 // pred_check_branch
      %26 = sbr.rel (0) target = $region13
    $region12: #{tpu_custom_call.1} parent=1 // pred_region
      _
    $region13: #{tpu_custom_call.1} parent=1 // pred_fallthru
      _
    // Predicated region
    $region14: #{tpu_custom_call.1} parent=1 // pred_check
      _
    $region15: #{tpu_custom_call.1} parent=1 // pred_check_branch
      %28 = sbr.rel (0) target = $region17
    $region16: #{tpu_custom_call.1} parent=1 // pred_region
      _
    $region17: #{tpu_custom_call.1} parent=1 // pred_fallthru
      _
    // Predicated region
    $region18: #{tpu_custom_call.1} parent=1 // pred_check
      _
    $region19: #{tpu_custom_call.1} parent=1 // pred_check_branch
      %30 = sbr.rel (0) target = $region21
    $region20: #{tpu_custom_call.1} parent=1 // pred_region
      _
    $region21: #{tpu_custom_call.1} parent=1 // pred_fallthru
      _
    // Predicated region
    $region22: #{tpu_custom_call.1} parent=1 // pred_check
      _
    $region23: #{tpu_custom_call.1} parent=1 // pred_check_branch
      %32 = sbr.rel (0) target = $region25
    $region24: #{tpu_custom_call.1} parent=1 // pred_region
      %34 = dma.done [#allocation4], 128
    $region25: #{tpu_custom_call.1} parent=1 // pred_fallthru
      _
    %35 = vst [vmem:[#allocation2] sm:$0xff] 0.0
    %36 = vst [vmem:[#allocation2 + $0x18] sm:$0xff] 0.0
    %37 = vst [vmem:[#allocation2 + $0x8] sm:$0xff] 0.0
    %38 = vst [vmem:[#allocation2 + $0x10] sm:$0xff] 0.0
    %v39 = vld [vmem:[%s0] sm:$0xf]
    %vm40 = vcmask 125952
    %41 = vst.msk [vmem:[#allocation2 + $0x8] sm:$0xf] %vm40, %v39
    %s42 = scalar_lea.vmem %s0, 4
    %v43 = vld [vmem:[%s42] sm:$0xf]
    %44 = vst.msk [vmem:[#allocation2 + $0x10] sm:$0xf] %vm40, %v43
    %v45 = vld [vmem:[#allocation3] sm:$0xff]
    %v46 = vld [vmem:[#allocation2] sm:$0xff]
    %v47 = vld [vmem:[#allocation2 + $0x8] sm:$0xff]
    %v48 = vld [vmem:[#allocation2 + $0x10] sm:$0xff]
    %51 = vrot.lane.b32.xlu0 %v47, 127
    %v52 = vpop.permute.xlu0 %51
    %53 = vrot.lane.b32.xlu0 %v48, 127
    %v54 = vpop.permute.xlu0 %53
    %vm55 = vcmask 1039360
    %v56 = vsel %vm55, %v52, %v54
    %v57 = vld [vmem:[%s2] sm:$0xff]
    %59 = vset.pattern.permute.xlu0 0
    %60 = vperm.xlu0 %59, %v57
    %v61 = vpop.permute.xlu0 %60
    %64 = vrot.lane.b32.xlu0 %v46, 1
    %v65 = vpop.permute.xlu0 %64
    %66 = vrot.lane.b32.xlu0 %v47, 1
    %v67 = vpop.permute.xlu0 %66
    %68 = vrot.lane.b32.xlu0 %v48, 1
    %v69 = vpop.permute.xlu0 %68
    %70 = vrot.lane.b32.xlu0 %v52, 1
    %v71 = vpop.permute.xlu0 %70
    %72 = vrot.lane.b32.xlu0 %v56, 1
    %v73 = vpop.permute.xlu0 %72
    %74 = vrot.lane.b32.xlu0 %v54, 1
    %v75 = vpop.permute.xlu0 %74
    %vm76 = vcmask 7168
    %v77 = vsel %vm76, %v65, %v67
    %v78 = vsel %vm76, %v67, %v69
    %v79 = vsel %vm76, %v71, %v73
    %v80 = vsel %vm76, %v73, %v75
    %vm85 = vcmask 130048
    %v87 = vsel %vm85, %v45, 0
    %89 = vmatpush.msra.mxu0 0.0
    %90 = vmatpush.msra.mxu0 0.0
    %91 = vmatpush.msra.mxu0 0.0
    %92 = vmatpush.msra.mxu0 0.0
    %93 = vmatpush.msra.mxu0 0.0
    %94 = vmatpush.msra.mxu0 0.0
    %95 = vmatpush.msra.mxu0 0.0
    %96 = vmatpush.msra.mxu0 0.0
    %97 = vmatpush.msra.mxu0 0.0
    %98 = vmatpush.msra.mxu0 0.0
    %99 = vmatpush.msra.mxu0 0.0
    %100 = vmatpush.msra.mxu0 0.0
    %101 = vmatpush.msra.mxu0 0.0
    %102 = vmatpush.msra.mxu0 0.0
    %103 = vmatpush.msra.mxu0 %v79
    %104 = vmatpush.msra.mxu0 %v77
    %105 = vmatmul.f32.gmra.mxu0 %v87
    %v106 = vpop.f32.mrf.mxu0
    %v107 = vadd.f32 %v61, %v106
    %108 = vdwg.mxu0
    %109 = vmatpush.msra.mxu0 0.0
    %110 = vmatpush.msra.mxu0 0.0
    %111 = vmatpush.msra.mxu0 0.0
    %112 = vmatpush.msra.mxu0 0.0
    %113 = vmatpush.msra.mxu0 0.0
    %114 = vmatpush.msra.mxu0 0.0
    %115 = vmatpush.msra.mxu0 0.0
    %116 = vmatpush.msra.mxu0 0.0
    %117 = vmatpush.msra.mxu0 0.0
    %118 = vmatpush.msra.mxu0 0.0
    %119 = vmatpush.msra.mxu0 0.0
    %120 = vmatpush.msra.mxu0 0.0
    %121 = vmatpush.msra.mxu0 0.0
    %122 = vmatpush.msra.mxu0 0.0
    %123 = vmatpush.msra.mxu0 %v80
    %124 = vmatpush.msra.mxu0 %v78
    %125 = vmatmul.f32.gmra.mxu0 %v87
    %v126 = vpop.f32.mrf.mxu0
    %v127 = vadd.f32 %v61, %v126
    %128 = vdwg.mxu0
    %v129 = vmax.f32 %v107, 0.0
    %v130 = vmax.f32 %v127, 0.0
    %131 = vst [vmem:[#allocation2 + $0x8] sm:$0xff] %v129
    %132 = vst [vmem:[#allocation2 + $0x10] sm:$0xff] %v130
    %vm133 = vcmask 1047688
    %134 = vst.msk [vmem:[#allocation2 + $0x8] sm:$0xff] %vm133, 0.0
    %135 = vst.msk [vmem:[#allocation2 + $0x10] sm:$0xff] %vm133, 0.0
    %v136 = vld [vmem:[%s3] sm:$0xff]
    %v137 = vld [vmem:[%s3 + $0x8] sm:$0xff]
    %v138 = vld [vmem:[#allocation2] sm:$0xff]
    %v139 = vld [vmem:[#allocation2 + $0x8] sm:$0xff]
    %v140 = vld [vmem:[#allocation2 + $0x10] sm:$0xff]
    %143 = vrot.lane.b32.xlu0 %v139, 126
    %v144 = vpop.permute.xlu0 %143
    %145 = vrot.lane.b32.xlu0 %v140, 126
    %v146 = vpop.permute.xlu0 %145
    %vm147 = vcmask 1031168
    %v148 = vsel %vm147, %v144, %v146
    %v149 = vld [vmem:[%s4] sm:$0xff]
    %v150 = vld [vmem:[%s4 + $0x8] sm:$0xff]
    %152 = vset.pattern.permute.xlu0 0
    %153 = vperm.xlu0 %152, %v149
    %v154 = vpop.permute.xlu0 %153
    %157 = vset.pattern.permute.xlu0 0
    %158 = vperm.xlu0 %157, %v150
    %v159 = vpop.permute.xlu0 %158
    %162 = vrot.lane.b32.xlu0 %v138, 2
    %v163 = vpop.permute.xlu0 %162
    %164 = vrot.lane.b32.xlu0 %v139, 2
    %v165 = vpop.permute.xlu0 %164
    %166 = vrot.lane.b32.xlu0 %v140, 2
    %v167 = vpop.permute.xlu0 %166
    %168 = vrot.lane.b32.xlu0 %v144, 2
    %v169 = vpop.permute.xlu0 %168
    %170 = vrot.lane.b32.xlu0 %v148, 2
    %v171 = vpop.permute.xlu0 %170
    %172 = vrot.lane.b32.xlu0 %v146, 2
    %v173 = vpop.permute.xlu0 %172
    %vm174 = vcmask 15360
    %v175 = vsel %vm174, %v163, %v165
    %v176 = vsel %vm174, %v165, %v167
    %v177 = vsel %vm174, %v169, %v171
    %v178 = vsel %vm174, %v171, %v173
    %v184 = vsel %vm85, %v136, 0
    %v187 = vsel %vm85, %v137, 0
    %189 = vmatpush.msra.mxu0 0.0
    %190 = vmatpush.msra.mxu0 0.0
    %191 = vmatpush.msra.mxu0 0.0
    %192 = vmatpush.msra.mxu0 0.0
    %193 = vmatpush.msra.mxu0 0.0
    %194 = vmatpush.msra.mxu0 0.0
    %195 = vmatpush.msra.mxu0 0.0
    %196 = vmatpush.msra.mxu0 0.0
    %197 = vmatpush.msra.mxu0 0.0
    %198 = vmatpush.msra.mxu0 0.0
    %199 = vmatpush.msra.mxu0 0.0
    %200 = vmatpush.msra.mxu0 0.0
    %201 = vmatpush.msra.mxu0 0.0
    %202 = vmatpush.msra.mxu0 0.0
    %203 = vmatpush.msra.mxu0 %v177
    %204 = vmatpush.msra.mxu0 %v175
    %205 = vmatmul.f32.gmra.mxu0 %v184
    %v206 = vpop.f32.mrf.mxu0
    %v207 = vadd.f32 %v154, %v206
    %208 = vmatmul.f32.gmra.mxu0 %v187
    %v209 = vpop.f32.mrf.mxu0
    %v210 = vadd.f32 %v159, %v209
    %211 = vdwg.mxu0
    %212 = vmatpush.msra.mxu0 0.0
    %213 = vmatpush.msra.mxu0 0.0
    %214 = vmatpush.msra.mxu0 0.0
    %215 = vmatpush.msra.mxu0 0.0
    %216 = vmatpush.msra.mxu0 0.0
    %217 = vmatpush.msra.mxu0 0.0
    %218 = vmatpush.msra.mxu0 0.0
    %219 = vmatpush.msra.mxu0 0.0
    %220 = vmatpush.msra.mxu0 0.0
    %221 = vmatpush.msra.mxu0 0.0
    %222 = vmatpush.msra.mxu0 0.0
    %223 = vmatpush.msra.mxu0 0.0
    %224 = vmatpush.msra.mxu0 0.0
    %225 = vmatpush.msra.mxu0 0.0
    %226 = vmatpush.msra.mxu0 %v178
    %227 = vmatpush.msra.mxu0 %v176
    %228 = vmatmul.f32.gmra.mxu0 %v184
    %v229 = vpop.f32.mrf.mxu0
    %v230 = vadd.f32 %v154, %v229
    %231 = vmatmul.f32.gmra.mxu0 %v187
    %v232 = vpop.f32.mrf.mxu0
    %v233 = vadd.f32 %v159, %v232
    %234 = vdwg.mxu0
    %v235 = vmax.f32 %v207, 0.0
    %v236 = vmax.f32 %v230, 0.0
    %v237 = vmax.f32 %v210, 0.0
    %v238 = vmax.f32 %v233, 0.0
    %vm239 = vcmask 154624
    %240 = vst.msk [vmem:[#allocation6] sm:$0xff] %vm239, %v235
    %241 = vst.msk [vmem:[#allocation6 + $0x8] sm:$0xff] %vm239, %v237
    %s242 = scalar_lea.vmem [#allocation6], 16
    %243 = vst.msk [vmem:[%s242] sm:$0xff] %vm239, %v236
    %244 = vst.msk [vmem:[%s242 + $0x8] sm:$0xff] %vm239, %v238
    // Predicated region
    $region26: #{tpu_custom_call.1} parent=1 // pred_check
      _
    $region27: #{tpu_custom_call.1} parent=1 // pred_check_branch
      %246 = sbr.rel (0) target = $region29
    $region28: #{tpu_custom_call.1} parent=1 // pred_region
      %248 = vsyncadd [#allocation5], 0
      %s249 = sshll.u32 [#allocation6], 4
      %s250 = int_to_ptr.vmem [resolvable:$true] %s249
      %s251 = sshll.u32 %s5, 4
      %s252 = int_to_ptr.hbm [resolvable:$true] %s251
      %257 = dma.vmem_to_hbm [thread:$0]  %s250, 512, %s252, [#allocation5], 128, 128, 8
    $region29: #{tpu_custom_call.1} parent=1 // pred_fallthru
      _
    // Predicated region
    $region30: #{tpu_custom_call.1} parent=1 // pred_check
      _
    $region31: #{tpu_custom_call.1} parent=1 // pred_check_branch
      %259 = sbr.rel (0) target = $region33
    $region32: #{tpu_custom_call.1} parent=1 // pred_region
      %261 = dma.done [#allocation5], 512
    $region33: #{tpu_custom_call.1} parent=1 // pred_fallthru
      _
    %262 = vsyncpa [#allocation4], 1
    %263 = vsyncpa [#allocation5], 1

</llo_original>
